<compile_context>
chip_gen: v5e
topology: v5e:2x2
jax: 0.10.0
libtpu: 0.0.40
codegen_flags: <defaults>
</compile_context>

<pallas_src>
import jax
import jax.numpy as jnp
from jax.experimental import pallas as pl
from jax.experimental.pallas import tpu as pltpu

IN_DIM = 28 * 28          # 784
IN_PAD = 896              # 7 * 128, lane/K-aligned
HID_DIM = 128
OUT_DIM = 10
OUT_PAD = 128             # lane-dense output width
DEFAULT_TB = 512          # batch tile (rows per grid step)


def mlp_kernel(x_ref, w1_ref, b1_ref, w2_ref, b2_ref, o_ref):
    # fc1: bf16 x bf16 -> f32 accumulate on the MXU
    h = jnp.dot(x_ref[...], w1_ref[...], preferred_element_type=jnp.float32)
    # bias + ReLU in f32 on the VPU
    h = jnp.maximum(h + b1_ref[...], 0.0)
    # fc2: cast activations to bf16 for the MXU, accumulate in f32
    y = jnp.dot(h.astype(w2_ref.dtype), w2_ref[...],
                preferred_element_type=jnp.float32)
    o_ref[...] = (y + b2_ref[...]).astype(o_ref.dtype)


def _round_up(n, m):
    return ((n + m - 1) // m) * m


def simple_nn_forward(x, w1, b1, w2, b2, *, tb=DEFAULT_TB):
    """x: (B, 784) f32; w1: (784,128); b1: (1,128); w2: (128,10); b2: (1,10)."""
    B = x.shape[0]

    # --- batch tiling ---------------------------------------------------
    TB = min(tb, _round_up(B, 8))          # tile rows (multiple of 8 sublanes)
    B_pad = _round_up(B, TB)
    grid = (B_pad // TB,)

    # --- zero-pad to aligned shapes & cast matmul operands to bf16 -------
    x_p = jnp.zeros((B_pad, IN_PAD), jnp.float32)
    x_p = x_p.at[:B, :IN_DIM].set(x).astype(jnp.bfloat16)

    w1_p = jnp.zeros((IN_PAD, HID_DIM), jnp.float32)
    w1_p = w1_p.at[:IN_DIM, :].set(w1).astype(jnp.bfloat16)

    w2_p = jnp.zeros((HID_DIM, OUT_PAD), jnp.float32)
    w2_p = w2_p.at[:, :OUT_DIM].set(w2).astype(jnp.bfloat16)

    b1_p = b1.astype(jnp.float32)                       # (1, 128)
    b2_p = jnp.zeros((1, OUT_PAD), jnp.float32)
    b2_p = b2_p.at[:, :OUT_DIM].set(b2)                 # (1, 128)

    out = pl.pallas_call(
        mlp_kernel,
        out_shape=jax.ShapeDtypeStruct((B_pad, OUT_PAD), jnp.float32),
        grid=grid,
        in_specs=[
            # x: tiled over the batch axis
            pl.BlockSpec((TB, IN_PAD), lambda i: (i, 0)),
            # weights / biases: constant index_map -> stay VMEM-resident
            pl.BlockSpec((IN_PAD, HID_DIM), lambda i: (0, 0)),
            pl.BlockSpec((1, HID_DIM), lambda i: (0, 0)),
            pl.BlockSpec((HID_DIM, OUT_PAD), lambda i: (0, 0)),
            pl.BlockSpec((1, OUT_PAD), lambda i: (0, 0)),
        ],
        out_specs=pl.BlockSpec((TB, OUT_PAD), lambda i: (i, 0)),
        compiler_params=pltpu.CompilerParams(
            dimension_semantics=("parallel",)),
    )(x_p, w1_p, b1_p, w2_p, b2_p)

    # slice away batch + output-column padding
    return out[:B, :OUT_DIM]


def init_params(key):
    """Deterministic init mimicking PyTorch nn.Linear (U(-1/sqrt(fan_in), +))."""
    k1, k2, k3, k4 = jax.random.split(key, 4)
    lim1 = 1.0 / jnp.sqrt(IN_DIM)
    lim2 = 1.0 / jnp.sqrt(HID_DIM)
    w1 = jax.random.uniform(k1, (IN_DIM, HID_DIM), jnp.float32, -lim1, lim1)
    b1 = jax.random.uniform(k2, (1, HID_DIM), jnp.float32, -lim1, lim1)
    w2 = jax.random.uniform(k3, (HID_DIM, OUT_DIM), jnp.float32, -lim2, lim2)
    b2 = jax.random.uniform(k4, (1, OUT_DIM), jnp.float32, -lim2, lim2)
    return w1, b1, w2, b2


def reference_forward_f32(x, w1, b1, w2, b2):
    h = jnp.maximum(x @ w1 + b1, 0.0)
    return h @ w2 + b2


def reference_forward_bf16(x, w1, b1, w2, b2):
    """Same precision scheme as the kernel (bf16 operands, f32 accumulate)."""
    f32 = jnp.float32
    xb = x.astype(jnp.bfloat16).astype(f32)
    w1b = w1.astype(jnp.bfloat16).astype(f32)
    w2b = w2.astype(jnp.bfloat16).astype(f32)
    h = jnp.maximum(xb @ w1b + b1, 0.0)
    hb = h.astype(jnp.bfloat16).astype(f32)
    return hb @ w2b + b2


if __name__ == "__main__":
    key = jax.random.PRNGKey(0)
    kx, kp = jax.random.split(key)

    B = 8
    x = jax.random.normal(kx, (B, IN_DIM), jnp.float32)
    w1, b1, w2, b2 = init_params(kp)

    out = simple_nn_forward(x, w1, b1, w2, b2)
    out = jax.block_until_ready(out)
    assert out.shape == (B, OUT_DIM)

    # Tight check against a reference using the kernel's bf16 precision scheme.
    ref_bf16 = reference_forward_bf16(x, w1, b1, w2, b2)
    assert jnp.allclose(out, ref_bf16, atol=1e-3, rtol=1e-3)

    # Loose sanity check against the pure-f32 reference (bf16 rounding error).
    ref_f32 = reference_forward_f32(x, w1, b1, w2, b2)
    assert jnp.allclose(out, ref_f32, atol=3e-2, rtol=3e-2)

    print("KERNEL_OK")
</pallas_src>

<mosaic_0001>
module attributes {stable_mosaic.version = 11 : i64} {
  func.func @mlp_kernel(%arg0: i32, %arg1: memref<8x896xbf16, #tpu.memory_space<vmem>>, %arg2: memref<896x128xbf16, #tpu.memory_space<vmem>>, %arg3: memref<1x128xf32, #tpu.memory_space<vmem>>, %arg4: memref<128x128xbf16, #tpu.memory_space<vmem>>, %arg5: memref<1x128xf32, #tpu.memory_space<vmem>>, %arg6: memref<8x128xf32, #tpu.memory_space<vmem>>) attributes {dimension_semantics = [#tpu.dimension_semantics<parallel>], iteration_bounds = array<i64: 1>, scalar_prefetch = 0 : i64, scratch_operands = 0 : i64, tpu.core_type = #tpu.core_type<tc>, window_params = [{transform_indices = @transform_0, window_bounds = array<i64: 8, 896>}, {pipeline_mode = #tpu.pipeline_mode<synchronous>, transform_indices = @transform_1, window_bounds = array<i64: 896, 128>}, {pipeline_mode = #tpu.pipeline_mode<synchronous>, transform_indices = @transform_2, window_bounds = array<i64: 1, 128>}, {pipeline_mode = #tpu.pipeline_mode<synchronous>, transform_indices = @transform_3, window_bounds = array<i64: 128, 128>}, {pipeline_mode = #tpu.pipeline_mode<synchronous>, transform_indices = @transform_4, window_bounds = array<i64: 1, 128>}, {transform_indices = @transform_5, window_bounds = array<i64: 8, 128>}]} {
    %c0 = arith.constant 0 : index
    %c0_0 = arith.constant 0 : index
    %0 = vector.load %arg1[%c0, %c0_0] : memref<8x896xbf16, #tpu.memory_space<vmem>>, vector<8x896xbf16>
    %c0_1 = arith.constant 0 : index
    %c0_2 = arith.constant 0 : index
    %1 = vector.load %arg2[%c0_1, %c0_2] : memref<896x128xbf16, #tpu.memory_space<vmem>>, vector<896x128xbf16>
    %cst = arith.constant dense<0.000000e+00> : vector<8x128xf32>
    %2 = tpu.matmul %0, %1, %cst {dimension_numbers = #tpu.dot_dimension_numbers<[1], [0], [0], [1], [0, 0, 1, 1], [], []>} : vector<8x896xbf16>, vector<896x128xbf16>, vector<8x128xf32> -> vector<8x128xf32>
    %c0_3 = arith.constant 0 : index
    %c0_4 = arith.constant 0 : index
    %3 = vector.load %arg3[%c0_3, %c0_4] : memref<1x128xf32, #tpu.memory_space<vmem>>, vector<1x128xf32>
    %4 = vector.broadcast %3 : vector<1x128xf32> to vector<8x128xf32>
    %5 = arith.addf %2, %4 : vector<8x128xf32>
    %cst_5 = arith.constant 0.000000e+00 : f32
    %6 = vector.broadcast %cst_5 : f32 to vector<8x128xf32>
    %7 = arith.maximumf %5, %6 : vector<8x128xf32>
    %8 = arith.truncf %7 : vector<8x128xf32> to vector<8x128xbf16>
    %c0_6 = arith.constant 0 : index
    %c0_7 = arith.constant 0 : index
    %9 = vector.load %arg4[%c0_6, %c0_7] : memref<128x128xbf16, #tpu.memory_space<vmem>>, vector<128x128xbf16>
    %cst_8 = arith.constant dense<0.000000e+00> : vector<8x128xf32>
    %10 = tpu.matmul %8, %9, %cst_8 {dimension_numbers = #tpu.dot_dimension_numbers<[1], [0], [0], [1], [0, 0, 1, 1], [], []>} : vector<8x128xbf16>, vector<128x128xbf16>, vector<8x128xf32> -> vector<8x128xf32>
    %c0_9 = arith.constant 0 : index
    %c0_10 = arith.constant 0 : index
    %11 = vector.load %arg5[%c0_9, %c0_10] : memref<1x128xf32, #tpu.memory_space<vmem>>, vector<1x128xf32>
    %12 = vector.broadcast %11 : vector<1x128xf32> to vector<8x128xf32>
    %13 = arith.addf %10, %12 : vector<8x128xf32>
    %c0_11 = arith.constant 0 : index
    %c0_12 = arith.constant 0 : index
    %14 = vector.load %arg6[%c0_11, %c0_12] : memref<8x128xf32, #tpu.memory_space<vmem>>, vector<8x128xf32>
    tpu.vector_store %arg6[%c0_11, %c0_12], %13 {strides = array<i32>} : memref<8x128xf32, #tpu.memory_space<vmem>>, vector<8x128xf32>,
    return
  }
  func.func @transform_0(%arg0: i32) -> (i32, i32) {
    %c0_i32 = arith.constant 0 : i32
    %c0_i32_0 = arith.constant 0 : i32
    return %arg0, %c0_i32 : i32, i32
  }
  func.func @transform_1(%arg0: i32) -> (i32, i32) {
    %c0_i32 = arith.constant 0 : i32
    %c0_i32_0 = arith.constant 0 : i32
    %c0_i32_1 = arith.constant 0 : i32
    return %c0_i32, %c0_i32_0 : i32, i32
  }
  func.func @transform_2(%arg0: i32) -> (i32, i32) {
    %c0_i32 = arith.constant 0 : i32
    %c0_i32_0 = arith.constant 0 : i32
    %c0_i32_1 = arith.constant 0 : i32
    return %c0_i32, %c0_i32_0 : i32, i32
  }
  func.func @transform_3(%arg0: i32) -> (i32, i32) {
    %c0_i32 = arith.constant 0 : i32
    %c0_i32_0 = arith.constant 0 : i32
    %c0_i32_1 = arith.constant 0 : i32
    return %c0_i32, %c0_i32_0 : i32, i32
  }
  func.func @transform_4(%arg0: i32) -> (i32, i32) {
    %c0_i32 = arith.constant 0 : i32
    %c0_i32_0 = arith.constant 0 : i32
    %c0_i32_1 = arith.constant 0 : i32
    return %c0_i32, %c0_i32_0 : i32, i32
  }
  func.func @transform_5(%arg0: i32) -> (i32, i32) {
    %c0_i32 = arith.constant 0 : i32
    %c0_i32_0 = arith.constant 0 : i32
    return %arg0, %c0_i32 : i32, i32
  }
}

</mosaic_0001>

<llo_original>
// kernel: tpu_custom_call.1
$region0: #{tpu_custom_call.1}
  #allocation0 [shape = 'u32[]', space=smem, size = 0x4, offset = 0x4, fixed_abs, tag = 'smem constant byte address 0x4 - core index']
  #allocation1 [shape = 'u32[72,128]{1,0:T(1,128)}', space=vmem, size = 0x9000, scoped, tag = 'internal scratch']
  %s0 = inlined_call_operand.hbm [shape: bf16[8,896], index: 0, kind: input, shape index: {}]
  %s1 = inlined_call_operand.hbm [shape: bf16[896,128], index: 1, kind: input, shape index: {}]
  %s2 = inlined_call_operand.vmem [shape: f32[1,128], index: 2, kind: input, shape index: {}]
  %s3 = inlined_call_operand.hbm [shape: bf16[128,128], index: 3, kind: input, shape index: {}]
  %s4 = inlined_call_operand.vmem [shape: f32[1,128], index: 4, kind: input, shape index: {}]
  %s5 = inlined_call_operand.hbm [shape: f32[8,128], index: 5, kind: output, shape index: {}]
  %s6 = sld [smem:[#allocation0]]
  $region42: #{tpu_custom_call.1} parent=0
    _
  %s8 = ssub.s32 1, %s6
  %s9 = scalar_select 0, %s8, %s6
  $region1: #{tpu_custom_call.1} parent=0
    #allocation2 [shape = 'u8[14336]{0}', space=vmem, size = 0x3800, scoped, tag = 'input window, operand 0, single buffered']
    #allocation3 [shape = 's32[1]{0}', space=sflag, size = 0x4, scoped, tag = 'scoped memory for tpu_custom_call.1']
    #allocation4 [shape = 's32[1]{0}', space=sflag, size = 0x4, scoped, tag = 'scoped memory for tpu_custom_call.1']
    #allocation5 [shape = 'u8[229376]{0}', space=vmem, size = 0x38000, scoped, tag = 'input window, operand 1, single buffered']
    #allocation6 [shape = 's32[1]{0}', space=sflag, size = 0x4, scoped, tag = 'scoped memory for tpu_custom_call.1']
    #allocation7 [shape = 'u8[32768]{0}', space=vmem, size = 0x8000, scoped, tag = 'input window, operand 3, single buffered']
    #allocation8 [shape = 'u8[4096]{0}', space=vmem, size = 0x1000, scoped, tag = 'output window, operand 0, single buffered']
    %10 = vsyncpa [#allocation3], 0
    %11 = vsyncpa [#allocation6], 0
    %12 = vsyncpa [#allocation4], 0
    // Predicated region
    $region2: #{tpu_custom_call.1} parent=1 // pred_check
      _
    $region3: #{tpu_custom_call.1} parent=1 // pred_check_branch
      %14 = sbr.rel (0) target = $region5
    $region4: #{tpu_custom_call.1} parent=1 // pred_region
      %16 = vsyncadd [#allocation3], 0
      %s18 = sshll.u32 %s0, 4
      %s19 = int_to_ptr.hbm [resolvable:$true] %s18
      %s20 = sshll.u32 [#allocation2], 4
      %s21 = int_to_ptr.vmem [resolvable:$true] %s20
      %23 = dma.hbm_to_vmem [thread:$0]  %s19, 448, %s21, [#allocation3]
    $region5: #{tpu_custom_call.1} parent=1 // pred_fallthru
      _
    // Predicated region
    $region6: #{tpu_custom_call.1} parent=1 // pred_check
      _
    $region7: #{tpu_custom_call.1} parent=1 // pred_check_branch
      %25 = sbr.rel (0) target = $region9
    $region8: #{tpu_custom_call.1} parent=1 // pred_region
      %27 = vsyncadd [#allocation6], 0
      %s28 = sshll.u32 %s1, 4
      %s29 = int_to_ptr.hbm [resolvable:$true] %s28
      %s30 = sshll.u32 [#allocation5], 4
      %s31 = int_to_ptr.vmem [resolvable:$true] %s30
      %36 = dma.hbm_to_vmem [thread:$0]  %s29, 7168, %s31, [#allocation6], 64, 64, 4
    $region9: #{tpu_custom_call.1} parent=1 // pred_fallthru
      _
    // Predicated region
    $region10: #{tpu_custom_call.1} parent=1 // pred_check
      _
    $region11: #{tpu_custom_call.1} parent=1 // pred_check_branch
      %38 = sbr.rel (0) target = $region13
    $region12: #{tpu_custom_call.1} parent=1 // pred_region
      _
    $region13: #{tpu_custom_call.1} parent=1 // pred_fallthru
      _
    // Predicated region
    $region14: #{tpu_custom_call.1} parent=1 // pred_check
      _
    $region15: #{tpu_custom_call.1} parent=1 // pred_check_branch
      %40 = sbr.rel (0) target = $region17
    $region16: #{tpu_custom_call.1} parent=1 // pred_region
      %42 = vsyncadd [#allocation6], 0
      %s43 = sshll.u32 %s3, 4
      %s44 = int_to_ptr.hbm [resolvable:$true] %s43
      %s45 = sshll.u32 [#allocation7], 4
      %s46 = int_to_ptr.vmem [resolvable:$true] %s45
      %51 = dma.hbm_to_vmem [thread:$0]  %s44, 1024, %s46, [#allocation6], 64, 64, 4
    $region17: #{tpu_custom_call.1} parent=1 // pred_fallthru
      _
    // Predicated region
    $region18: #{tpu_custom_call.1} parent=1 // pred_check
      _
    $region19: #{tpu_custom_call.1} parent=1 // pred_check_branch
      %53 = sbr.rel (0) target = $region21
    $region20: #{tpu_custom_call.1} parent=1 // pred_region
      _
    $region21: #{tpu_custom_call.1} parent=1 // pred_fallthru
      _
    // Predicated region
    $region22: #{tpu_custom_call.1} parent=1 // pred_check
      _
    $region23: #{tpu_custom_call.1} parent=1 // pred_check_branch
      %55 = sbr.rel (0) target = $region25
    $region24: #{tpu_custom_call.1} parent=1 // pred_region
      %57 = dma.done [#allocation3], 448
    $region25: #{tpu_custom_call.1} parent=1 // pred_fallthru
      _
    // Predicated region
    $region26: #{tpu_custom_call.1} parent=1 // pred_check
      _
    $region27: #{tpu_custom_call.1} parent=1 // pred_check_branch
      %59 = sbr.rel (0) target = $region29
    $region28: #{tpu_custom_call.1} parent=1 // pred_region
      %61 = dma.done [#allocation6], 7168
    $region29: #{tpu_custom_call.1} parent=1 // pred_fallthru
      _
    // Predicated region
    $region30: #{tpu_custom_call.1} parent=1 // pred_check
      _
    $region31: #{tpu_custom_call.1} parent=1 // pred_check_branch
      %63 = sbr.rel (0) target = $region33
    $region32: #{tpu_custom_call.1} parent=1 // pred_region
      %65 = dma.done [#allocation6], 1024
    $region33: #{tpu_custom_call.1} parent=1 // pred_fallthru
      _
    %v66 = vld [vmem:[#allocation2] sm:$0xff]
    %v67 = vld [vmem:[#allocation2 + $0x8] sm:$0xff]
    %v68 = vld [vmem:[#allocation2 + $0x10] sm:$0xff]
    %v69 = vld [vmem:[#allocation2 + $0x18] sm:$0xf]
    %v70 = vld [vmem:[#allocation5] sm:$0xf]
    %v71 = vld [vmem:[#allocation5 + $0x4] sm:$0xf]
    %v72 = vld [vmem:[#allocation5 + $0x8] sm:$0xf]
    %v73 = vld [vmem:[#allocation5 + $0xc] sm:$0xf]
    %v74 = vld [vmem:[#allocation5 + $0x10] sm:$0xf]
    %v75 = vld [vmem:[#allocation5 + $0x14] sm:$0xf]
    %v76 = vld [vmem:[#allocation5 + $0x18] sm:$0xf]
    %v77 = vld [vmem:[#allocation5 + $0x1c] sm:$0xf]
    %v78 = vld [vmem:[#allocation5 + $0x20] sm:$0xf]
    %v79 = vld [vmem:[#allocation5 + $0x24] sm:$0xf]
    %v80 = vld [vmem:[#allocation5 + $0x28] sm:$0xf]
    %v81 = vld [vmem:[#allocation5 + $0x2c] sm:$0xf]
    %v82 = vld [vmem:[#allocation5 + $0x30] sm:$0xf]
    %v83 = vld [vmem:[#allocation5 + $0x34] sm:$0xf]
    %v84 = vld [vmem:[#allocation5 + $0x38] sm:$0xf]
    %v85 = vld [vmem:[#allocation5 + $0x3c] sm:$0xf]
    %v86 = vld [vmem:[#allocation5 + $0x40] sm:$0xf]
    %v87 = vld [vmem:[#allocation5 + $0x44] sm:$0xf]
    %v88 = vld [vmem:[#allocation5 + $0x48] sm:$0xf]
    %v89 = vld [vmem:[#allocation5 + $0x4c] sm:$0xf]
    %v90 = vld [vmem:[#allocation5 + $0x50] sm:$0xf]
    %v91 = vld [vmem:[#allocation5 + $0x54] sm:$0xf]
    %v92 = vld [vmem:[#allocation5 + $0x58] sm:$0xf]
    %v93 = vld [vmem:[#allocation5 + $0x5c] sm:$0xf]
    %v94 = vld [vmem:[#allocation5 + $0x60] sm:$0xf]
    %v95 = vld [vmem:[#allocation5 + $0x64] sm:$0xf]
    %v96 = vld [vmem:[#allocation5 + $0x68] sm:$0xf]
    %v97 = vld [vmem:[#allocation5 + $0x6c] sm:$0xf]
    %v98 = vld [vmem:[#allocation5 + $0x70] sm:$0xf]
    %v99 = vld [vmem:[#allocation5 + $0x74] sm:$0xf]
    %v100 = vld [vmem:[#allocation5 + $0x78] sm:$0xf]
    %v101 = vld [vmem:[#allocation5 + $0x7c] sm:$0xf]
    %v102 = vld [vmem:[#allocation5 + $0x80] sm:$0xf]
    %v103 = vld [vmem:[#allocation5 + $0x84] sm:$0xf]
    %v104 = vld [vmem:[#allocation5 + $0x88] sm:$0xf]
    %v105 = vld [vmem:[#allocation5 + $0x8c] sm:$0xf]
    %v106 = vld [vmem:[#allocation5 + $0x90] sm:$0xf]
    %v107 = vld [vmem:[#allocation5 + $0x94] sm:$0xf]
    %v108 = vld [vmem:[#allocation5 + $0x98] sm:$0xf]
    %v109 = vld [vmem:[#allocation5 + $0x9c] sm:$0xf]
    %v110 = vld [vmem:[#allocation5 + $0xa0] sm:$0xf]
    %v111 = vld [vmem:[#allocation5 + $0xa4] sm:$0xf]
    %v112 = vld [vmem:[#allocation5 + $0xa8] sm:$0xf]
    %v113 = vld [vmem:[#allocation5 + $0xac] sm:$0xf]
    %v114 = vld [vmem:[#allocation5 + $0xb0] sm:$0xf]
    %v115 = vld [vmem:[#allocation5 + $0xb4] sm:$0xf]
    %v116 = vld [vmem:[#allocation5 + $0xb8] sm:$0xf]
    %v117 = vld [vmem:[#allocation5 + $0xbc] sm:$0xf]
    %v118 = vld [vmem:[#allocation5 + $0xc0] sm:$0xf]
    %v119 = vld [vmem:[#allocation5 + $0xc4] sm:$0xf]
    %v120 = vld [vmem:[#allocation5 + $0xc8] sm:$0xf]
    %v121 = vld [vmem:[#allocation5 + $0xcc] sm:$0xf]
    %v122 = vld [vmem:[#allocation5 + $0xd0] sm:$0xf]
    %v123 = vld [vmem:[#allocation5 + $0xd4] sm:$0xf]
    %v124 = vld [vmem:[#allocation5 + $0xd8] sm:$0xf]
    %v125 = vld [vmem:[#allocation5 + $0xdc] sm:$0xf]
    %v126 = vld [vmem:[#allocation5 + $0xe0] sm:$0xf]
    %v127 = vld [vmem:[#allocation5 + $0xe4] sm:$0xf]
    %v128 = vld [vmem:[#allocation5 + $0xe8] sm:$0xf]
    %v129 = vld [vmem:[#allocation5 + $0xec] sm:$0xf]
    %v130 = vld [vmem:[#allocation5 + $0xf0] sm:$0xf]
    %v131 = vld [vmem:[#allocation5 + $0xf4] sm:$0xf]
    %v132 = vld [vmem:[#allocation5 + $0xf8] sm:$0xf]
    %v133 = vld [vmem:[#allocation5 + $0xfc] sm:$0xf]
    %v134 = vld [vmem:[#allocation5 + $0x100] sm:$0xf]
    %v135 = vld [vmem:[#allocation5 + $0x104] sm:$0xf]
    %v136 = vld [vmem:[#allocation5 + $0x108] sm:$0xf]
    %v137 = vld [vmem:[#allocation5 + $0x10c] sm:$0xf]
    %v138 = vld [vmem:[#allocation5 + $0x110] sm:$0xf]
    %v139 = vld [vmem:[#allocation5 + $0x114] sm:$0xf]
    %v140 = vld [vmem:[#allocation5 + $0x118] sm:$0xf]
    %v141 = vld [vmem:[#allocation5 + $0x11c] sm:$0xf]
    %v142 = vld [vmem:[#allocation5 + $0x120] sm:$0xf]
    %v143 = vld [vmem:[#allocation5 + $0x124] sm:$0xf]
    %v144 = vld [vmem:[#allocation5 + $0x128] sm:$0xf]
    %v145 = vld [vmem:[#allocation5 + $0x12c] sm:$0xf]
    %v146 = vld [vmem:[#allocation5 + $0x130] sm:$0xf]
    %v147 = vld [vmem:[#allocation5 + $0x134] sm:$0xf]
    %v148 = vld [vmem:[#allocation5 + $0x138] sm:$0xf]
    %v149 = vld [vmem:[#allocation5 + $0x13c] sm:$0xf]
    %v150 = vld [vmem:[#allocation5 + $0x140] sm:$0xf]
    %v151 = vld [vmem:[#allocation5 + $0x144] sm:$0xf]
    %v152 = vld [vmem:[#allocation5 + $0x148] sm:$0xf]
    %v153 = vld [vmem:[#allocation5 + $0x14c] sm:$0xf]
    %v154 = vld [vmem:[#allocation5 + $0x150] sm:$0xf]
    %v155 = vld [vmem:[#allocation5 + $0x154] sm:$0xf]
    %v156 = vld [vmem:[#allocation5 + $0x158] sm:$0xf]
    %v157 = vld [vmem:[#allocation5 + $0x15c] sm:$0xf]
    %v158 = vld [vmem:[#allocation5 + $0x160] sm:$0xf]
    %v159 = vld [vmem:[#allocation5 + $0x164] sm:$0xf]
    %v160 = vld [vmem:[#allocation5 + $0x168] sm:$0xf]
    %v161 = vld [vmem:[#allocation5 + $0x16c] sm:$0xf]
    %v162 = vld [vmem:[#allocation5 + $0x170] sm:$0xf]
    %v163 = vld [vmem:[#allocation5 + $0x174] sm:$0xf]
    %v164 = vld [vmem:[#allocation5 + $0x178] sm:$0xf]
    %v165 = vld [vmem:[#allocation5 + $0x17c] sm:$0xf]
    %v166 = vld [vmem:[#allocation5 + $0x180] sm:$0xf]
    %v167 = vld [vmem:[#allocation5 + $0x184] sm:$0xf]
    %v168 = vld [vmem:[#allocation5 + $0x188] sm:$0xf]
    %v169 = vld [vmem:[#allocation5 + $0x18c] sm:$0xf]
    %v170 = vld [vmem:[#allocation5 + $0x190] sm:$0xf]
    %v171 = vld [vmem:[#allocation5 + $0x194] sm:$0xf]
    %v172 = vld [vmem:[#allocation5 + $0x198] sm:$0xf]
    %v173 = vld [vmem:[#allocation5 + $0x19c] sm:$0xf]
    %v174 = vld [vmem:[#allocation5 + $0x1a0] sm:$0xf]
    %v175 = vld [vmem:[#allocation5 + $0x1a4] sm:$0xf]
    %v176 = vld [vmem:[#allocation5 + $0x1a8] sm:$0xf]
    %v177 = vld [vmem:[#allocation5 + $0x1ac] sm:$0xf]
    %v178 = vld [vmem:[#allocation5 + $0x1b0] sm:$0xf]
    %v179 = vld [vmem:[#allocation5 + $0x1b4] sm:$0xf]
    %v180 = vld [vmem:[#allocation5 + $0x1b8] sm:$0xf]
    %v181 = vld [vmem:[#allocation5 + $0x1bc] sm:$0xf]
    %v182 = vld [vmem:[%s2] sm:$0x1]
    %v184 = vperm.slane %v182, 0
    %v190 = vunpack.c.l.b16 %v66
    %v191 = vunpack.c.h.b16 %v66
    %v192 = vunpack.c.l.b16 %v67
    %v193 = vunpack.c.h.b16 %v67
    %v194 = vunpack.c.l.b16 %v68
    %v195 = vunpack.c.h.b16 %v68
    %v196 = vunpack.c.l.b16 %v69
    %v197 = vpack.c.b16 %v190, %v190
    %v198 = vpack.c.b16 %v191, %v191
    %v199 = vpack.c.b16 %v192, %v192
    %v200 = vpack.c.b16 %v193, %v193
    %v201 = vpack.c.b16 %v194, %v194
    %v202 = vpack.c.b16 %v195, %v195
    %v203 = vpack.c.b16 %v196, %v196
    %v323 = vunpack.c.l.b16 %v70
    %v324 = vunpack.c.l.b16 %v71
    %v325 = vunpack.c.l.b16 %v72
    %v326 = vunpack.c.l.b16 %v73
    %v327 = vunpack.c.l.b16 %v74
    %v328 = vunpack.c.l.b16 %v75
    %v329 = vunpack.c.l.b16 %v76
    %v330 = vunpack.c.l.b16 %v77
    %v331 = vunpack.c.l.b16 %v78
    %v332 = vunpack.c.l.b16 %v79
    %v333 = vunpack.c.l.b16 %v80
    %v334 = vunpack.c.l.b16 %v81
    %v335 = vunpack.c.l.b16 %v82
    %v336 = vunpack.c.l.b16 %v83
    %v337 = vunpack.c.l.b16 %v84
    %v338 = vunpack.c.l.b16 %v85
    %v339 = vunpack.c.l.b16 %v86
    %v340 = vunpack.c.l.b16 %v87
    %v341 = vunpack.c.l.b16 %v88
    %v342 = vunpack.c.l.b16 %v89
    %v343 = vunpack.c.l.b16 %v90
    %v344 = vunpack.c.l.b16 %v91
    %v345 = vunpack.c.l.b16 %v92
    %v346 = vunpack.c.l.b16 %v93
    %v347 = vunpack.c.l.b16 %v94
    %v348 = vunpack.c.l.b16 %v95
    %v349 = vunpack.c.l.b16 %v96
    %v350 = vunpack.c.l.b16 %v97
    %v351 = vunpack.c.l.b16 %v98
    %v352 = vunpack.c.l.b16 %v99
    %v353 = vunpack.c.l.b16 %v100
    %v354 = vunpack.c.l.b16 %v101
    %v355 = vunpack.c.l.b16 %v102
    %v356 = vunpack.c.l.b16 %v103
    %v357 = vunpack.c.l.b16 %v104
    %v358 = vunpack.c.l.b16 %v105
    %v359 = vunpack.c.l.b16 %v106
    %v360 = vunpack.c.l.b16 %v107
    %v361 = vunpack.c.l.b16 %v108
    %v362 = vunpack.c.l.b16 %v109
    %v363 = vunpack.c.l.b16 %v110
    %v364 = vunpack.c.l.b16 %v111
    %v365 = vunpack.c.l.b16 %v112
    %v366 = vunpack.c.l.b16 %v113
    %v367 = vunpack.c.l.b16 %v114
    %v368 = vunpack.c.l.b16 %v115
    %v369 = vunpack.c.l.b16 %v116
    %v370 = vunpack.c.l.b16 %v117
    %v371 = vunpack.c.l.b16 %v118
    %v372 = vunpack.c.l.b16 %v119
    %v373 = vunpack.c.l.b16 %v120
    %v374 = vunpack.c.l.b16 %v121
    %v375 = vunpack.c.l.b16 %v122
    %v376 = vunpack.c.l.b16 %v123
    %v377 = vunpack.c.l.b16 %v124
    %v378 = vunpack.c.l.b16 %v125
    %v379 = vunpack.c.l.b16 %v126
    %v380 = vunpack.c.l.b16 %v127
    %v381 = vunpack.c.l.b16 %v128
    %v382 = vunpack.c.l.b16 %v129
    %v383 = vunpack.c.l.b16 %v130
    %v384 = vunpack.c.l.b16 %v131
    %v385 = vunpack.c.l.b16 %v132
    %v386 = vunpack.c.l.b16 %v133
    %v387 = vunpack.c.l.b16 %v134
    %v388 = vunpack.c.l.b16 %v135
    %v389 = vunpack.c.l.b16 %v136
    %v390 = vunpack.c.l.b16 %v137
    %v391 = vunpack.c.l.b16 %v138
    %v392 = vunpack.c.l.b16 %v139
    %v393 = vunpack.c.l.b16 %v140
    %v394 = vunpack.c.l.b16 %v141
    %v395 = vunpack.c.l.b16 %v142
    %v396 = vunpack.c.l.b16 %v143
    %v397 = vunpack.c.l.b16 %v144
    %v398 = vunpack.c.l.b16 %v145
    %v399 = vunpack.c.l.b16 %v146
    %v400 = vunpack.c.l.b16 %v147
    %v401 = vunpack.c.l.b16 %v148
    %v402 = vunpack.c.l.b16 %v149
    %v403 = vunpack.c.l.b16 %v150
    %v404 = vunpack.c.l.b16 %v151
    %v405 = vunpack.c.l.b16 %v152
    %v406 = vunpack.c.l.b16 %v153
    %v407 = vunpack.c.l.b16 %v154
    %v408 = vunpack.c.l.b16 %v155
    %v409 = vunpack.c.l.b16 %v156
    %v410 = vunpack.c.l.b16 %v157
    %v411 = vunpack.c.l.b16 %v158
    %v412 = vunpack.c.l.b16 %v159
    %v413 = vunpack.c.l.b16 %v160
    %v414 = vunpack.c.l.b16 %v161
    %v415 = vunpack.c.l.b16 %v162
    %v416 = vunpack.c.l.b16 %v163
    %v417 = vunpack.c.l.b16 %v164
    %v418 = vunpack.c.l.b16 %v165
    %v419 = vunpack.c.l.b16 %v166
    %v420 = vunpack.c.l.b16 %v167
    %v421 = vunpack.c.l.b16 %v168
    %v422 = vunpack.c.l.b16 %v169
    %v423 = vunpack.c.l.b16 %v170
    %v424 = vunpack.c.l.b16 %v171
    %v425 = vunpack.c.l.b16 %v172
    %v426 = vunpack.c.l.b16 %v173
    %v427 = vunpack.c.l.b16 %v174
    %v428 = vunpack.c.l.b16 %v175
    %v429 = vunpack.c.l.b16 %v176
    %v430 = vunpack.c.l.b16 %v177
    %v431 = vunpack.c.l.b16 %v178
    %v432 = vunpack.c.l.b16 %v179
    %v433 = vunpack.c.l.b16 %v180
    %v434 = vunpack.c.l.b16 %v181
    %v435 = vpack.c.b16 %v324, %v323
    %v436 = vpack.c.b16 %v326, %v325
    %v437 = vpack.c.b16 %v328, %v327
    %v438 = vpack.c.b16 %v330, %v329
    %v439 = vpack.c.b16 %v332, %v331
    %v440 = vpack.c.b16 %v334, %v333
    %v441 = vpack.c.b16 %v336, %v335
    %v442 = vpack.c.b16 %v338, %v337
    %v443 = vpack.c.b16 %v340, %v339
    %v444 = vpack.c.b16 %v342, %v341
    %v445 = vpack.c.b16 %v344, %v343
    %v446 = vpack.c.b16 %v346, %v345
    %v447 = vpack.c.b16 %v348, %v347
    %v448 = vpack.c.b16 %v350, %v349
    %v449 = vpack.c.b16 %v352, %v351
    %v450 = vpack.c.b16 %v354, %v353
    %v451 = vpack.c.b16 %v356, %v355
    %v452 = vpack.c.b16 %v358, %v357
    %v453 = vpack.c.b16 %v360, %v359
    %v454 = vpack.c.b16 %v362, %v361
    %v455 = vpack.c.b16 %v364, %v363
    %v456 = vpack.c.b16 %v366, %v365
    %v457 = vpack.c.b16 %v368, %v367
    %v458 = vpack.c.b16 %v370, %v369
    %v459 = vpack.c.b16 %v372, %v371
    %v460 = vpack.c.b16 %v374, %v373
    %v461 = vpack.c.b16 %v376, %v375
    %v462 = vpack.c.b16 %v378, %v377
    %v463 = vpack.c.b16 %v380, %v379
    %v464 = vpack.c.b16 %v382, %v381
    %v465 = vpack.c.b16 %v384, %v383
    %v466 = vpack.c.b16 %v386, %v385
    %v467 = vpack.c.b16 %v388, %v387
    %v468 = vpack.c.b16 %v390, %v389
    %v469 = vpack.c.b16 %v392, %v391
    %v470 = vpack.c.b16 %v394, %v393
    %v471 = vpack.c.b16 %v396, %v395
    %v472 = vpack.c.b16 %v398, %v397
    %v473 = vpack.c.b16 %v400, %v399
    %v474 = vpack.c.b16 %v402, %v401
    %v475 = vpack.c.b16 %v404, %v403
    %v476 = vpack.c.b16 %v406, %v405
    %v477 = vpack.c.b16 %v408, %v407
    %v478 = vpack.c.b16 %v410, %v409
    %v479 = vpack.c.b16 %v412, %v411
    %v480 = vpack.c.b16 %v414, %v413
    %v481 = vpack.c.b16 %v416, %v415
    %v482 = vpack.c.b16 %v418, %v417
    %v483 = vpack.c.b16 %v420, %v419
    %v484 = vpack.c.b16 %v422, %v421
    %v485 = vpack.c.b16 %v424, %v423
    %v486 = vpack.c.b16 %v426, %v425
    %v487 = vpack.c.b16 %v428, %v427
    %v488 = vpack.c.b16 %v430, %v429
    %v489 = vpack.c.b16 %v432, %v431
    %v490 = vpack.c.b16 %v434, %v433
    %547 = vmatpush.bf16.msra.mxu0 %v442
    %548 = vmatpush.bf16.msra.mxu0 %v441
    %549 = vmatpush.bf16.msra.mxu0 %v440
    %550 = vmatpush.bf16.msra.mxu0 %v439
    %551 = vmatpush.bf16.msra.mxu0 %v438
    %552 = vmatpush.bf16.msra.mxu0 %v437
    %553 = vmatpush.bf16.msra.mxu0 %v436
    %554 = vmatpush.bf16.msra.mxu0 %v435
    %555 = vmatmul.bf16.gmra.mxu0 %v197
    %v556 = vpop.f32.mrf.mxu0
    %v557 = vadd.f32 %v184, %v556
    %v558 = vpop.f32.mrf.mxu0
    %559 = vdwg.mxu0
    %560 = vmatpush.bf16.msra.mxu0 %v450
    %561 = vmatpush.bf16.msra.mxu0 %v449
    %562 = vmatpush.bf16.msra.mxu0 %v448
    %563 = vmatpush.bf16.msra.mxu0 %v447
    %564 = vmatpush.bf16.msra.mxu0 %v446
    %565 = vmatpush.bf16.msra.mxu0 %v445
    %566 = vmatpush.bf16.msra.mxu0 %v444
    %567 = vmatpush.bf16.msra.mxu0 %v443
    %568 = vmatmul.bf16.gmra.mxu0 %v198
    %v569 = vpop.f32.mrf.mxu0
    %v570 = vadd.f32 %v557, %v569
    %v571 = vpop.f32.mrf.mxu0
    %572 = vdwg.mxu0
    %573 = vmatpush.bf16.msra.mxu0 %v458
    %574 = vmatpush.bf16.msra.mxu0 %v457
    %575 = vmatpush.bf16.msra.mxu0 %v456
    %576 = vmatpush.bf16.msra.mxu0 %v455
    %577 = vmatpush.bf16.msra.mxu0 %v454
    %578 = vmatpush.bf16.msra.mxu0 %v453
    %579 = vmatpush.bf16.msra.mxu0 %v452
    %580 = vmatpush.bf16.msra.mxu0 %v451
    %581 = vmatmul.bf16.gmra.mxu0 %v199
    %v582 = vpop.f32.mrf.mxu0
    %v583 = vadd.f32 %v570, %v582
    %v584 = vpop.f32.mrf.mxu0
    %585 = vdwg.mxu0
    %586 = vmatpush.bf16.msra.mxu0 %v466
    %587 = vmatpush.bf16.msra.mxu0 %v465
    %588 = vmatpush.bf16.msra.mxu0 %v464
    %589 = vmatpush.bf16.msra.mxu0 %v463
    %590 = vmatpush.bf16.msra.mxu0 %v462
    %591 = vmatpush.bf16.msra.mxu0 %v461
    %592 = vmatpush.bf16.msra.mxu0 %v460
    %593 = vmatpush.bf16.msra.mxu0 %v459
    %594 = vmatmul.bf16.gmra.mxu0 %v200
    %v595 = vpop.f32.mrf.mxu0
    %v596 = vadd.f32 %v583, %v595
    %v597 = vpop.f32.mrf.mxu0
    %598 = vdwg.mxu0
    %599 = vmatpush.bf16.msra.mxu0 %v474
    %600 = vmatpush.bf16.msra.mxu0 %v473
    %601 = vmatpush.bf16.msra.mxu0 %v472
    %602 = vmatpush.bf16.msra.mxu0 %v471
    %603 = vmatpush.bf16.msra.mxu0 %v470
    %604 = vmatpush.bf16.msra.mxu0 %v469
    %605 = vmatpush.bf16.msra.mxu0 %v468
    %606 = vmatpush.bf16.msra.mxu0 %v467
    %607 = vmatmul.bf16.gmra.mxu0 %v201
    %v608 = vpop.f32.mrf.mxu0
    %v609 = vadd.f32 %v596, %v608
    %v610 = vpop.f32.mrf.mxu0
    %611 = vdwg.mxu0
    %612 = vmatpush.bf16.msra.mxu0 %v482
    %613 = vmatpush.bf16.msra.mxu0 %v481
    %614 = vmatpush.bf16.msra.mxu0 %v480
    %615 = vmatpush.bf16.msra.mxu0 %v479
    %616 = vmatpush.bf16.msra.mxu0 %v478
    %617 = vmatpush.bf16.msra.mxu0 %v477
    %618 = vmatpush.bf16.msra.mxu0 %v476
    %619 = vmatpush.bf16.msra.mxu0 %v475
    %620 = vmatmul.bf16.gmra.mxu0 %v202
    %v621 = vpop.f32.mrf.mxu0
    %v622 = vadd.f32 %v609, %v621
    %v623 = vpop.f32.mrf.mxu0
    %624 = vdwg.mxu0
    %625 = vmatpush.bf16.msra.mxu0 %v490
    %626 = vmatpush.bf16.msra.mxu0 %v489
    %627 = vmatpush.bf16.msra.mxu0 %v488
    %628 = vmatpush.bf16.msra.mxu0 %v487
    %629 = vmatpush.bf16.msra.mxu0 %v486
    %630 = vmatpush.bf16.msra.mxu0 %v485
    %631 = vmatpush.bf16.msra.mxu0 %v484
    %632 = vmatpush.bf16.msra.mxu0 %v483
    %633 = vmatmul.bf16.gmra.mxu0 %v203
    %v634 = vpop.f32.mrf.mxu0
    %v635 = vadd.f32 %v622, %v634
    %v636 = vpop.f32.mrf.mxu0
    %637 = vdwg.mxu0
    %v638 = vmax.f32 %v635, 0.0
    %v639 = vpack.c.bf16 %v638, %v638
    %v640 = vld [vmem:[#allocation7] sm:$0xf]
    %v641 = vld [vmem:[#allocation7 + $0x4] sm:$0xf]
    %v642 = vld [vmem:[#allocation7 + $0x8] sm:$0xf]
    %v643 = vld [vmem:[#allocation7 + $0xc] sm:$0xf]
    %v644 = vld [vmem:[#allocation7 + $0x10] sm:$0xf]
    %v645 = vld [vmem:[#allocation7 + $0x14] sm:$0xf]
    %v646 = vld [vmem:[#allocation7 + $0x18] sm:$0xf]
    %v647 = vld [vmem:[#allocation7 + $0x1c] sm:$0xf]
    %v648 = vld [vmem:[#allocation7 + $0x20] sm:$0xf]
    %v649 = vld [vmem:[#allocation7 + $0x24] sm:$0xf]
    %v650 = vld [vmem:[#allocation7 + $0x28] sm:$0xf]
    %v651 = vld [vmem:[#allocation7 + $0x2c] sm:$0xf]
    %v652 = vld [vmem:[#allocation7 + $0x30] sm:$0xf]
    %v653 = vld [vmem:[#allocation7 + $0x34] sm:$0xf]
    %v654 = vld [vmem:[#allocation7 + $0x38] sm:$0xf]
    %v655 = vld [vmem:[#allocation7 + $0x3c] sm:$0xf]
    %v656 = vld [vmem:[%s4] sm:$0x1]
    %v658 = vperm.slane %v656, 0
    %v676 = vunpack.c.l.b16 %v640
    %v677 = vunpack.c.l.b16 %v641
    %v678 = vunpack.c.l.b16 %v642
    %v679 = vunpack.c.l.b16 %v643
    %v680 = vunpack.c.l.b16 %v644
    %v681 = vunpack.c.l.b16 %v645
    %v682 = vunpack.c.l.b16 %v646
    %v683 = vunpack.c.l.b16 %v647
    %v684 = vunpack.c.l.b16 %v648
    %v685 = vunpack.c.l.b16 %v649
    %v686 = vunpack.c.l.b16 %v650
    %v687 = vunpack.c.l.b16 %v651
    %v688 = vunpack.c.l.b16 %v652
    %v689 = vunpack.c.l.b16 %v653
    %v690 = vunpack.c.l.b16 %v654
    %v691 = vunpack.c.l.b16 %v655
    %v692 = vpack.c.b16 %v677, %v676
    %v693 = vpack.c.b16 %v679, %v678
    %v694 = vpack.c.b16 %v681, %v680
    %v695 = vpack.c.b16 %v683, %v682
    %v696 = vpack.c.b16 %v685, %v684
    %v697 = vpack.c.b16 %v687, %v686
    %v698 = vpack.c.b16 %v689, %v688
    %v699 = vpack.c.b16 %v691, %v690
    %708 = vmatpush.bf16.msra.mxu0 %v699
    %709 = vmatpush.bf16.msra.mxu0 %v698
    %710 = vmatpush.bf16.msra.mxu0 %v697
    %711 = vmatpush.bf16.msra.mxu0 %v696
    %712 = vmatpush.bf16.msra.mxu0 %v695
    %713 = vmatpush.bf16.msra.mxu0 %v694
    %714 = vmatpush.bf16.msra.mxu0 %v693
    %715 = vmatpush.bf16.msra.mxu0 %v692
    %716 = vmatmul.bf16.gmra.mxu0 %v639
    %v717 = vpop.f32.mrf.mxu0
    %v718 = vadd.f32 %v658, %v717
    %v719 = vpop.f32.mrf.mxu0
    %720 = vdwg.mxu0
    %721 = vst [vmem:[#allocation8] sm:$0xff] %v718
    // Predicated region
    $region34: #{tpu_custom_call.1} parent=1 // pred_check
      _
    $region35: #{tpu_custom_call.1} parent=1 // pred_check_branch
      %723 = sbr.rel (0) target = $region37
    $region36: #{tpu_custom_call.1} parent=1 // pred_region
      %725 = vsyncadd [#allocation4], 0
      %s727 = sshll.u32 [#allocation8], 4
      %s728 = int_to_ptr.vmem [resolvable:$true] %s727
      %s729 = sshll.u32 %s5, 4
      %s730 = int_to_ptr.hbm [resolvable:$true] %s729
      %732 = dma.vmem_to_hbm [thread:$0]  %s728, 128, %s730, [#allocation4]
    $region37: #{tpu_custom_call.1} parent=1 // pred_fallthru
      _
    // Predicated region
    $region38: #{tpu_custom_call.1} parent=1 // pred_check
      _
    $region39: #{tpu_custom_call.1} parent=1 // pred_check_branch
      %734 = sbr.rel (0) target = $region41
    $region40: #{tpu_custom_call.1} parent=1 // pred_region
      %736 = dma.done [#allocation4], 128
    $region41: #{tpu_custom_call.1} parent=1 // pred_fallthru
      _
    %737 = vsyncpa [#allocation3], 1
    %738 = vsyncpa [#allocation6], 1
    %739 = vsyncpa [#allocation4], 1

</llo_original>
